<compile_context>
chip_gen: v7x
topology: tpu7x:2x2x1
jax: 0.10.0
libtpu: 0.0.40
codegen_flags: <defaults>
</compile_context>

<pallas_src>
import jax
import jax.numpy as jnp
from jax.experimental import pallas as pl
from jax.experimental.pallas import tpu as pltpu

EPS = 1e-5


def attr_head_kernel(x_ref, w_ref, b_ref, out_ref):
    # x_ref:   (TB, C, HW)   feature tile (NCHW flattened over spatial)
    # w_ref:   (C, NC_pad)   folded classifier weight (BN2, BN1, 1/HW absorbed)
    # b_ref:   (1, NC_pad)   folded bias
    # out_ref: (TB, NC_pad)  sigmoid(logits), lane-dense padded
    pooled = jnp.sum(x_ref[...], axis=-1)                       # (TB, C)
    logits = jnp.dot(pooled, w_ref[...],
                     preferred_element_type=jnp.float32)        # (TB, NC_pad)
    logits = logits + b_ref[...]                                # bias broadcast
    out_ref[...] = jax.nn.sigmoid(logits)


def _round_up(x, m):
    return ((x + m - 1) // m) * m


def _pick_batch_tile(B, C, HW, max_tile_bytes=12 << 20):
    """Batch tile: multiple of 8 sublanes, per-buffer x tile <= ~12 MiB."""
    per_row = C * HW * 4
    tb = max(8, min((max_tile_bytes // per_row) // 8 * 8, 128))
    tb = min(tb, _round_up(B, 8))
    return max(tb, 8)


def attr_head_forward(x_nchw, bn2_params, weight, bn1_params):
    """x_nchw: (B, C, H, W) f32; weight: (num_classes, feat_dim) f32.

    bn2_params / bn1_params: rows [gamma, beta, running_mean, running_var].
    """
    B, C, H, W = x_nchw.shape
    HW = H * W
    NC = weight.shape[0]

    # ---- fold BN2 + BN1 + mean scale into a single weight / bias (once) ----
    g2, b2, m2, v2 = bn2_params
    g1, b1, m1, v1 = bn1_params
    s2 = g2 * jax.lax.rsqrt(v2 + EPS)                    # (C,)
    s1 = g1 * jax.lax.rsqrt(v1 + EPS)                    # (NC,)
    w_t = weight.T                                       # (C, NC)
    w_fold = (s2[:, None] * w_t) * s1[None, :] / float(HW)          # (C, NC)
    b_fold = ((b2 - m2 * s2) @ w_t) * s1 + (b1 - m1 * s1)           # (NC,)

    # ---- pad classifier output to a lane-dense width (multiple of 128) ----
    NC_pad = max(128, _round_up(NC, 128))
    w_pad = jnp.zeros((C, NC_pad), jnp.float32).at[:, :NC].set(w_fold)
    b_pad = jnp.zeros((1, NC_pad), jnp.float32).at[0, :NC].set(b_fold)

    # ---- pad batch to a multiple of the (8-aligned) batch tile ----
    TB = _pick_batch_tile(B, C, HW)
    B_pad = _round_up(B, TB)
    x_flat = x_nchw.reshape(B, C, HW)
    if B_pad != B:
        x_flat = jnp.pad(x_flat, ((0, B_pad - B), (0, 0), (0, 0)))

    grid = (B_pad // TB,)

    # ---- scoped VMEM limit: 2x (x tile + out tile) + resident params ----
    x_tile_bytes = TB * C * HW * 4
    out_tile_bytes = TB * NC_pad * 4
    param_bytes = (C * NC_pad + NC_pad) * 4
    needed = 2 * (x_tile_bytes + out_tile_bytes) + 2 * param_bytes + (4 << 20)
    vmem_limit = int(min(max(needed, 16 << 20), 48 << 20))

    out_padded = pl.pallas_call(
        attr_head_kernel,
        out_shape=jax.ShapeDtypeStruct((B_pad, NC_pad), jnp.float32),
        grid_spec=pltpu.PrefetchScalarGridSpec(
            num_scalar_prefetch=0,
            grid=grid,
            in_specs=[
                pl.BlockSpec((TB, C, HW), lambda i: (i, 0, 0)),   # x tile
                pl.BlockSpec((C, NC_pad), lambda i: (0, 0)),      # weight (resident)
                pl.BlockSpec((1, NC_pad), lambda i: (0, 0)),      # bias (resident)
            ],
            out_specs=pl.BlockSpec((TB, NC_pad), lambda i: (i, 0)),
        ),
        compiler_params=pltpu.CompilerParams(
            dimension_semantics=("parallel",),
            vmem_limit_bytes=vmem_limit,
        ),
    )(x_flat, w_pad, b_pad)

    return out_padded[:B, :NC]


def reference_forward(x_nchw, bn2_params, weight, bn1_params):
    """Pure-JAX reference mirroring the PyTorch eval-mode forward."""
    B, C, H, W = x_nchw.shape
    pooled = x_nchw.reshape(B, C, -1).mean(-1)                              # (B, C)
    g2, b2, m2, v2 = bn2_params
    neck = (pooled - m2) / jnp.sqrt(v2 + EPS) * g2 + b2
    logits = neck @ weight.T
    g1, b1, m1, v1 = bn1_params
    logits = (logits - m1) / jnp.sqrt(v1 + EPS) * g1 + b1
    return jax.nn.sigmoid(logits)


if __name__ == "__main__":
    # Small shapes consistent with the module: features (B, feat_dim, H, W)
    B, feat_dim, H, W = 2, 32, 16, 16
    num_classes = 8

    key = jax.random.PRNGKey(0)
    k_x, k_w = jax.random.split(key)

    x = jax.random.normal(k_x, (B, feat_dim, H, W), dtype=jnp.float32)

    # Parameter init (deterministic, matching __init__ semantics):
    #  - classifier weight ~ N(0, 0.01)
    #  - BatchNorm: gamma=1, beta=0, running_mean=0, running_var=1
    weight = 0.01 * jax.random.normal(k_w, (num_classes, feat_dim), dtype=jnp.float32)

    bn2_params = jnp.stack([
        jnp.ones((feat_dim,), jnp.float32),    # gamma
        jnp.zeros((feat_dim,), jnp.float32),   # beta (bias_freeze=True, still 0)
        jnp.zeros((feat_dim,), jnp.float32),   # running_mean
        jnp.ones((feat_dim,), jnp.float32),    # running_var
    ])
    bn1_params = jnp.stack([
        jnp.ones((num_classes,), jnp.float32),
        jnp.zeros((num_classes,), jnp.float32),
        jnp.zeros((num_classes,), jnp.float32),
        jnp.ones((num_classes,), jnp.float32),
    ])

    out = attr_head_forward(x, bn2_params, weight, bn1_params)
    out = jax.block_until_ready(out)

    ref = reference_forward(x, bn2_params, weight, bn1_params)
    assert out.shape == (B, num_classes)
    assert jnp.allclose(out, ref, atol=1e-5, rtol=1e-5), "mismatch vs reference"

    print("KERNEL_OK")
</pallas_src>

<mosaic_0001>
module attributes {stable_mosaic.version = 11 : i64} {
  func.func @attr_head_kernel(%arg0: i32, %arg1: memref<8x32x256xf32, #tpu.memory_space<vmem>>, %arg2: memref<32x128xf32, #tpu.memory_space<vmem>>, %arg3: memref<1x128xf32, #tpu.memory_space<vmem>>, %arg4: memref<8x128xf32, #tpu.memory_space<vmem>>) attributes {dimension_semantics = [#tpu.dimension_semantics<parallel>], iteration_bounds = array<i64: 1>, scalar_prefetch = 0 : i64, scratch_operands = 0 : i64, tpu.core_type = #tpu.core_type<tc>, window_params = [{transform_indices = @transform_0, window_bounds = array<i64: 8, 32, 256>}, {pipeline_mode = #tpu.pipeline_mode<synchronous>, transform_indices = @transform_1, window_bounds = array<i64: 32, 128>}, {pipeline_mode = #tpu.pipeline_mode<synchronous>, transform_indices = @transform_2, window_bounds = array<i64: 1, 128>}, {transform_indices = @transform_3, window_bounds = array<i64: 8, 128>}]} {
    %c0 = arith.constant 0 : index
    %c0_0 = arith.constant 0 : index
    %c0_1 = arith.constant 0 : index
    %0 = vector.load %arg1[%c0, %c0_0, %c0_1] : memref<8x32x256xf32, #tpu.memory_space<vmem>>, vector<8x32x256xf32>
    %cst = arith.constant dense<0.000000e+00> : vector<8x32xf32>
    %1 = vector.multi_reduction <add>, %0, %cst [2] : vector<8x32x256xf32> to vector<8x32xf32>
    %c0_2 = arith.constant 0 : index
    %c0_3 = arith.constant 0 : index
    %2 = vector.load %arg2[%c0_2, %c0_3] : memref<32x128xf32, #tpu.memory_space<vmem>>, vector<32x128xf32>
    %cst_4 = arith.constant dense<0.000000e+00> : vector<8x128xf32>
    %3 = tpu.matmul %1, %2, %cst_4 {dimension_numbers = #tpu.dot_dimension_numbers<[1], [0], [0], [1], [0, 0, 1, 1], [], []>} : vector<8x32xf32>, vector<32x128xf32>, vector<8x128xf32> -> vector<8x128xf32>
    %c0_5 = arith.constant 0 : index
    %c0_6 = arith.constant 0 : index
    %4 = vector.load %arg3[%c0_5, %c0_6] : memref<1x128xf32, #tpu.memory_space<vmem>>, vector<1x128xf32>
    %5 = vector.broadcast %4 : vector<1x128xf32> to vector<8x128xf32>
    %6 = arith.addf %3, %5 : vector<8x128xf32>
    %7 = arith.negf %6 : vector<8x128xf32>
    %8 = math.exp %7 : vector<8x128xf32>
    %cst_7 = arith.constant 1.000000e+00 : f32
    %9 = vector.broadcast %cst_7 : f32 to vector<8x128xf32>
    %10 = arith.addf %9, %8 : vector<8x128xf32>
    %11 = arith.divf %9, %10 : vector<8x128xf32>
    %c0_8 = arith.constant 0 : index
    %c0_9 = arith.constant 0 : index
    %12 = vector.load %arg4[%c0_8, %c0_9] : memref<8x128xf32, #tpu.memory_space<vmem>>, vector<8x128xf32>
    tpu.vector_store %arg4[%c0_8, %c0_9], %11 {strides = array<i32>} : memref<8x128xf32, #tpu.memory_space<vmem>>, vector<8x128xf32>,
    return
  }
  func.func @transform_0(%arg0: i32) -> (i32, i32, i32) {
    %c0_i32 = arith.constant 0 : i32
    %c0_i32_0 = arith.constant 0 : i32
    %c0_i32_1 = arith.constant 0 : i32
    return %arg0, %c0_i32, %c0_i32_0 : i32, i32, i32
  }
  func.func @transform_1(%arg0: i32) -> (i32, i32) {
    %c0_i32 = arith.constant 0 : i32
    %c0_i32_0 = arith.constant 0 : i32
    %c0_i32_1 = arith.constant 0 : i32
    return %c0_i32, %c0_i32_0 : i32, i32
  }
  func.func @transform_2(%arg0: i32) -> (i32, i32) {
    %c0_i32 = arith.constant 0 : i32
    %c0_i32_0 = arith.constant 0 : i32
    %c0_i32_1 = arith.constant 0 : i32
    return %c0_i32, %c0_i32_0 : i32, i32
  }
  func.func @transform_3(%arg0: i32) -> (i32, i32) {
    %c0_i32 = arith.constant 0 : i32
    %c0_i32_0 = arith.constant 0 : i32
    return %arg0, %c0_i32 : i32, i32
  }
}

</mosaic_0001>

<llo_original>
// kernel: tpu_custom_call.1
$region0: #{tpu_custom_call.1}
  #allocation0 [shape = 'u32[]', space=smem, size = 0x4, offset = 0x4, fixed_abs, tag = 'smem constant byte address 0x4 - core index']
  #allocation1 [shape = 'u32[144,128]{1,0:T(1,128)}', space=vmem, size = 0x12000, scoped, tag = 'internal scratch']
  %s0 = inlined_call_operand.hbm [shape: f32[8,32,256], index: 0, kind: input, shape index: {}]
  %s1 = inlined_call_operand.hbm [shape: f32[32,128], index: 1, kind: input, shape index: {}]
  %s2 = inlined_call_operand.vmem [shape: f32[1,128], index: 2, kind: input, shape index: {}]
  %s3 = inlined_call_operand.hbm [shape: f32[8,128], index: 3, kind: output, shape index: {}]
  %s4 = sld [smem:[#allocation0]]
  $region30: #{tpu_custom_call.1} parent=0
    _
  %s6 = ssub.s32 1, %s4
  %s7 = scalar_select 0, %s6, %s4
  $region1: #{tpu_custom_call.1} parent=0
    #allocation2 [shape = 'u8[262144]{0}', space=vmem, size = 0x40000, scoped, tag = 'input window, operand 0, single buffered']
    #allocation3 [shape = 's32[1]{0}', space=sflag, size = 0x4, scoped, tag = 'scoped memory for tpu_custom_call.1']
    #allocation4 [shape = 's32[1]{0}', space=sflag, size = 0x4, scoped, tag = 'scoped memory for tpu_custom_call.1']
    #allocation5 [shape = 'u8[16384]{0}', space=vmem, size = 0x4000, scoped, tag = 'input window, operand 1, single buffered']
    #allocation6 [shape = 's32[1]{0}', space=sflag, size = 0x4, scoped, tag = 'scoped memory for tpu_custom_call.1']
    #allocation7 [shape = 'u8[4096]{0}', space=vmem, size = 0x1000, scoped, tag = 'output window, operand 0, single buffered']
    %8 = vsyncpa [#allocation3], 0
    %9 = vsyncpa [#allocation6], 0
    %10 = vsyncpa [#allocation4], 0
    // Predicated region
    $region2: #{tpu_custom_call.1} parent=1 // pred_check
      _
    $region3: #{tpu_custom_call.1} parent=1 // pred_check_branch
      %12 = sbr.rel (0) target = $region5
    $region4: #{tpu_custom_call.1} parent=1 // pred_region
      %s14 = ssub.s32 8192, 8192
      %15 = vsyncadd [#allocation3], %s14
      %s16 = sshll.u32 [#allocation2], 4
      %s17 = int_to_ptr.vmem [resolvable:$true] %s16
      %22 = dma.hbm_to_vmem [thread:$0]  %s0, 8192, %s17, [#allocation3], 256, 256, 16
    $region5: #{tpu_custom_call.1} parent=1 // pred_fallthru
      _
    // Predicated region
    $region6: #{tpu_custom_call.1} parent=1 // pred_check
      _
    $region7: #{tpu_custom_call.1} parent=1 // pred_check_branch
      %24 = sbr.rel (0) target = $region9
    $region8: #{tpu_custom_call.1} parent=1 // pred_region
      %s26 = ssub.s32 512, 512
      %27 = vsyncadd [#allocation6], %s26
      %s28 = sshll.u32 [#allocation5], 4
      %s29 = int_to_ptr.vmem [resolvable:$true] %s28
      %34 = dma.hbm_to_vmem [thread:$0]  %s1, 512, %s29, [#allocation6], 128, 128, 8
    $region9: #{tpu_custom_call.1} parent=1 // pred_fallthru
      _
    // Predicated region
    $region10: #{tpu_custom_call.1} parent=1 // pred_check
      _
    $region11: #{tpu_custom_call.1} parent=1 // pred_check_branch
      %36 = sbr.rel (0) target = $region13
    $region12: #{tpu_custom_call.1} parent=1 // pred_region
      _
    $region13: #{tpu_custom_call.1} parent=1 // pred_fallthru
      _
    // Predicated region
    $region14: #{tpu_custom_call.1} parent=1 // pred_check
      _
    $region15: #{tpu_custom_call.1} parent=1 // pred_check_branch
      %38 = sbr.rel (0) target = $region17
    $region16: #{tpu_custom_call.1} parent=1 // pred_region
      %39 = dma.done [#allocation3], 8192
    $region17: #{tpu_custom_call.1} parent=1 // pred_fallthru
      _
    // Predicated region
    $region18: #{tpu_custom_call.1} parent=1 // pred_check
      _
    $region19: #{tpu_custom_call.1} parent=1 // pred_check_branch
      %41 = sbr.rel (0) target = $region21
    $region20: #{tpu_custom_call.1} parent=1 // pred_region
      %42 = dma.done [#allocation6], 512
    $region21: #{tpu_custom_call.1} parent=1 // pred_fallthru
      _
    %v43 = vld [vmem:[#allocation2] sm:$0xff]
    %v44 = vld [vmem:[#allocation2 + $0x8] sm:$0xff]
    %v45 = vld [vmem:[#allocation2 + $0x10] sm:$0xff]
    %v46 = vld [vmem:[#allocation2 + $0x18] sm:$0xff]
    %v47 = vld [vmem:[#allocation2 + $0x20] sm:$0xff]
    %v48 = vld [vmem:[#allocation2 + $0x28] sm:$0xff]
    %v49 = vld [vmem:[#allocation2 + $0x30] sm:$0xff]
    %v50 = vld [vmem:[#allocation2 + $0x38] sm:$0xff]
    %v51 = vld [vmem:[#allocation2 + $0x40] sm:$0xff]
    %v52 = vld [vmem:[#allocation2 + $0x48] sm:$0xff]
    %v53 = vld [vmem:[#allocation2 + $0x50] sm:$0xff]
    %v54 = vld [vmem:[#allocation2 + $0x58] sm:$0xff]
    %v55 = vld [vmem:[#allocation2 + $0x60] sm:$0xff]
    %v56 = vld [vmem:[#allocation2 + $0x68] sm:$0xff]
    %v57 = vld [vmem:[#allocation2 + $0x70] sm:$0xff]
    %v58 = vld [vmem:[#allocation2 + $0x78] sm:$0xff]
    %v59 = vld [vmem:[#allocation2 + $0x80] sm:$0xff]
    %v60 = vld [vmem:[#allocation2 + $0x88] sm:$0xff]
    %v61 = vld [vmem:[#allocation2 + $0x90] sm:$0xff]
    %v62 = vld [vmem:[#allocation2 + $0x98] sm:$0xff]
    %v63 = vld [vmem:[#allocation2 + $0xa0] sm:$0xff]
    %v64 = vld [vmem:[#allocation2 + $0xa8] sm:$0xff]
    %v65 = vld [vmem:[#allocation2 + $0xb0] sm:$0xff]
    %v66 = vld [vmem:[#allocation2 + $0xb8] sm:$0xff]
    %v67 = vld [vmem:[#allocation2 + $0xc0] sm:$0xff]
    %v68 = vld [vmem:[#allocation2 + $0xc8] sm:$0xff]
    %v69 = vld [vmem:[#allocation2 + $0xd0] sm:$0xff]
    %v70 = vld [vmem:[#allocation2 + $0xd8] sm:$0xff]
    %v71 = vld [vmem:[#allocation2 + $0xe0] sm:$0xff]
    %v72 = vld [vmem:[#allocation2 + $0xe8] sm:$0xff]
    %v73 = vld [vmem:[#allocation2 + $0xf0] sm:$0xff]
    %v74 = vld [vmem:[#allocation2 + $0xf8] sm:$0xff]
    %v75 = vld [vmem:[#allocation2 + $0x100] sm:$0xff]
    %v76 = vld [vmem:[#allocation2 + $0x108] sm:$0xff]
    %v77 = vld [vmem:[#allocation2 + $0x110] sm:$0xff]
    %v78 = vld [vmem:[#allocation2 + $0x118] sm:$0xff]
    %v79 = vld [vmem:[#allocation2 + $0x120] sm:$0xff]
    %v80 = vld [vmem:[#allocation2 + $0x128] sm:$0xff]
    %v81 = vld [vmem:[#allocation2 + $0x130] sm:$0xff]
    %v82 = vld [vmem:[#allocation2 + $0x138] sm:$0xff]
    %v83 = vld [vmem:[#allocation2 + $0x140] sm:$0xff]
    %v84 = vld [vmem:[#allocation2 + $0x148] sm:$0xff]
    %v85 = vld [vmem:[#allocation2 + $0x150] sm:$0xff]
    %v86 = vld [vmem:[#allocation2 + $0x158] sm:$0xff]
    %v87 = vld [vmem:[#allocation2 + $0x160] sm:$0xff]
    %v88 = vld [vmem:[#allocation2 + $0x168] sm:$0xff]
    %v89 = vld [vmem:[#allocation2 + $0x170] sm:$0xff]
    %v90 = vld [vmem:[#allocation2 + $0x178] sm:$0xff]
    %v91 = vld [vmem:[#allocation2 + $0x180] sm:$0xff]
    %v92 = vld [vmem:[#allocation2 + $0x188] sm:$0xff]
    %v93 = vld [vmem:[#allocation2 + $0x190] sm:$0xff]
    %v94 = vld [vmem:[#allocation2 + $0x198] sm:$0xff]
    %v95 = vld [vmem:[#allocation2 + $0x1a0] sm:$0xff]
    %v96 = vld [vmem:[#allocation2 + $0x1a8] sm:$0xff]
    %v97 = vld [vmem:[#allocation2 + $0x1b0] sm:$0xff]
    %v98 = vld [vmem:[#allocation2 + $0x1b8] sm:$0xff]
    %v99 = vld [vmem:[#allocation2 + $0x1c0] sm:$0xff]
    %v100 = vld [vmem:[#allocation2 + $0x1c8] sm:$0xff]
    %v101 = vld [vmem:[#allocation2 + $0x1d0] sm:$0xff]
    %v102 = vld [vmem:[#allocation2 + $0x1d8] sm:$0xff]
    %v103 = vld [vmem:[#allocation2 + $0x1e0] sm:$0xff]
    %v104 = vld [vmem:[#allocation2 + $0x1e8] sm:$0xff]
    %v105 = vld [vmem:[#allocation2 + $0x1f0] sm:$0xff]
    %v106 = vld [vmem:[#allocation2 + $0x1f8] sm:$0xff]
    %v107 = vadd.f32 %v43, %v44
    %108 = vadd.xlane.f32.xlu0 %v107
    %v109 = vpop.xlane.xlu0 %108
    %v110 = vadd.f32 %v45, %v46
    %111 = vadd.xlane.f32.xlu0 %v110
    %v112 = vpop.xlane.xlu0 %111
    %v113 = vadd.f32 %v47, %v48
    %114 = vadd.xlane.f32.xlu0 %v113
    %v115 = vpop.xlane.xlu0 %114
    %v116 = vadd.f32 %v49, %v50
    %117 = vadd.xlane.f32.xlu0 %v116
    %v118 = vpop.xlane.xlu0 %117
    %v119 = vadd.f32 %v51, %v52
    %120 = vadd.xlane.f32.xlu0 %v119
    %v121 = vpop.xlane.xlu0 %120
    %v122 = vadd.f32 %v53, %v54
    %123 = vadd.xlane.f32.xlu0 %v122
    %v124 = vpop.xlane.xlu0 %123
    %v125 = vadd.f32 %v55, %v56
    %126 = vadd.xlane.f32.xlu0 %v125
    %v127 = vpop.xlane.xlu0 %126
    %v128 = vadd.f32 %v57, %v58
    %129 = vadd.xlane.f32.xlu0 %v128
    %v130 = vpop.xlane.xlu0 %129
    %v131 = vadd.f32 %v59, %v60
    %132 = vadd.xlane.f32.xlu0 %v131
    %v133 = vpop.xlane.xlu0 %132
    %v134 = vadd.f32 %v61, %v62
    %135 = vadd.xlane.f32.xlu0 %v134
    %v136 = vpop.xlane.xlu0 %135
    %v137 = vadd.f32 %v63, %v64
    %138 = vadd.xlane.f32.xlu0 %v137
    %v139 = vpop.xlane.xlu0 %138
    %v140 = vadd.f32 %v65, %v66
    %141 = vadd.xlane.f32.xlu0 %v140
    %v142 = vpop.xlane.xlu0 %141
    %v143 = vadd.f32 %v67, %v68
    %144 = vadd.xlane.f32.xlu0 %v143
    %v145 = vpop.xlane.xlu0 %144
    %v146 = vadd.f32 %v69, %v70
    %147 = vadd.xlane.f32.xlu0 %v146
    %v148 = vpop.xlane.xlu0 %147
    %v149 = vadd.f32 %v71, %v72
    %150 = vadd.xlane.f32.xlu0 %v149
    %v151 = vpop.xlane.xlu0 %150
    %v152 = vadd.f32 %v73, %v74
    %153 = vadd.xlane.f32.xlu0 %v152
    %v154 = vpop.xlane.xlu0 %153
    %v155 = vadd.f32 %v75, %v76
    %156 = vadd.xlane.f32.xlu0 %v155
    %v157 = vpop.xlane.xlu0 %156
    %v158 = vadd.f32 %v77, %v78
    %159 = vadd.xlane.f32.xlu0 %v158
    %v160 = vpop.xlane.xlu0 %159
    %v161 = vadd.f32 %v79, %v80
    %162 = vadd.xlane.f32.xlu0 %v161
    %v163 = vpop.xlane.xlu0 %162
    %v164 = vadd.f32 %v81, %v82
    %165 = vadd.xlane.f32.xlu0 %v164
    %v166 = vpop.xlane.xlu0 %165
    %v167 = vadd.f32 %v83, %v84
    %168 = vadd.xlane.f32.xlu0 %v167
    %v169 = vpop.xlane.xlu0 %168
    %v170 = vadd.f32 %v85, %v86
    %171 = vadd.xlane.f32.xlu0 %v170
    %v172 = vpop.xlane.xlu0 %171
    %v173 = vadd.f32 %v87, %v88
    %174 = vadd.xlane.f32.xlu0 %v173
    %v175 = vpop.xlane.xlu0 %174
    %v176 = vadd.f32 %v89, %v90
    %177 = vadd.xlane.f32.xlu0 %v176
    %v178 = vpop.xlane.xlu0 %177
    %v179 = vadd.f32 %v91, %v92
    %180 = vadd.xlane.f32.xlu0 %v179
    %v181 = vpop.xlane.xlu0 %180
    %v182 = vadd.f32 %v93, %v94
    %183 = vadd.xlane.f32.xlu0 %v182
    %v184 = vpop.xlane.xlu0 %183
    %v185 = vadd.f32 %v95, %v96
    %186 = vadd.xlane.f32.xlu0 %v185
    %v187 = vpop.xlane.xlu0 %186
    %v188 = vadd.f32 %v97, %v98
    %189 = vadd.xlane.f32.xlu0 %v188
    %v190 = vpop.xlane.xlu0 %189
    %v191 = vadd.f32 %v99, %v100
    %192 = vadd.xlane.f32.xlu0 %v191
    %v193 = vpop.xlane.xlu0 %192
    %v194 = vadd.f32 %v101, %v102
    %195 = vadd.xlane.f32.xlu0 %v194
    %v196 = vpop.xlane.xlu0 %195
    %v197 = vadd.f32 %v103, %v104
    %198 = vadd.xlane.f32.xlu0 %v197
    %v199 = vpop.xlane.xlu0 %198
    %v200 = vadd.f32 %v105, %v106
    %201 = vadd.xlane.f32.xlu0 %v200
    %v202 = vpop.xlane.xlu0 %201
    %v203 = vld [vmem:[#allocation5] sm:$0xff]
    %v204 = vld [vmem:[#allocation5 + $0x8] sm:$0xff]
    %v205 = vld [vmem:[#allocation5 + $0x10] sm:$0xff]
    %v206 = vld [vmem:[#allocation5 + $0x18] sm:$0xff]
    %v207 = vld [vmem:[%s2] sm:$0x1]
    %v209 = vlaneseq
    %v210 = vshrl.u32 %v209, 7
    %v211 = vsub.s32 0, %v210
    %v212 = vrot.slane %v207, %v211
    %v246 = vlaneseq
    %v247 = vand.u32 %v246, 127
    %v248 = vlaneseq
    %v249 = vshrl.u32 %v248, 7
    %v250 = vsub.s32 %v247, %v249
    %v251 = vrot.slane %v109, %v250
    %v252 = vadd.s32 %v247, 4294967288
    %v253 = vlaneseq
    %v254 = vshrl.u32 %v253, 7
    %v255 = vsub.s32 %v252, %v254
    %v256 = vrot.slane %v112, %v255
    %vm257 = vcmask 130112
    %v258 = vsel %vm257, %v256, %v251
    %v259 = vadd.s32 %v247, 4294967280
    %v260 = vlaneseq
    %v261 = vshrl.u32 %v260, 7
    %v262 = vsub.s32 %v259, %v261
    %v263 = vrot.slane %v115, %v262
    %vm264 = vcmask 195712
    %v265 = vsel %vm264, %v263, %v258
    %v266 = vadd.s32 %v247, 4294967272
    %v267 = vlaneseq
    %v268 = vshrl.u32 %v267, 7
    %v269 = vsub.s32 %v266, %v268
    %v270 = vrot.slane %v118, %v269
    %vm271 = vcmask 261312
    %v272 = vsel %vm271, %v270, %v265
    %v273 = vlaneseq
    %v274 = vshrl.u32 %v273, 7
    %v275 = vsub.s32 %v247, %v274
    %v276 = vrot.slane %v121, %v275
    %v277 = vlaneseq
    %v278 = vshrl.u32 %v277, 7
    %v279 = vsub.s32 %v252, %v278
    %v280 = vrot.slane %v124, %v279
    %v281 = vsel %vm257, %v280, %v276
    %v282 = vlaneseq
    %v283 = vshrl.u32 %v282, 7
    %v284 = vsub.s32 %v259, %v283
    %v285 = vrot.slane %v127, %v284
    %v286 = vsel %vm264, %v285, %v281
    %v287 = vlaneseq
    %v288 = vshrl.u32 %v287, 7
    %v289 = vsub.s32 %v266, %v288
    %v290 = vrot.slane %v130, %v289
    %v291 = vsel %vm271, %v290, %v286
    %v292 = vlaneseq
    %v293 = vshrl.u32 %v292, 7
    %v294 = vsub.s32 %v247, %v293
    %v295 = vrot.slane %v133, %v294
    %v296 = vlaneseq
    %v297 = vshrl.u32 %v296, 7
    %v298 = vsub.s32 %v252, %v297
    %v299 = vrot.slane %v136, %v298
    %v300 = vsel %vm257, %v299, %v295
    %v301 = vlaneseq
    %v302 = vshrl.u32 %v301, 7
    %v303 = vsub.s32 %v259, %v302
    %v304 = vrot.slane %v139, %v303
    %v305 = vsel %vm264, %v304, %v300
    %v306 = vlaneseq
    %v307 = vshrl.u32 %v306, 7
    %v308 = vsub.s32 %v266, %v307
    %v309 = vrot.slane %v142, %v308
    %v310 = vsel %vm271, %v309, %v305
    %v311 = vlaneseq
    %v312 = vshrl.u32 %v311, 7
    %v313 = vsub.s32 %v247, %v312
    %v314 = vrot.slane %v145, %v313
    %v315 = vlaneseq
    %v316 = vshrl.u32 %v315, 7
    %v317 = vsub.s32 %v252, %v316
    %v318 = vrot.slane %v148, %v317
    %v319 = vsel %vm257, %v318, %v314
    %v320 = vlaneseq
    %v321 = vshrl.u32 %v320, 7
    %v322 = vsub.s32 %v259, %v321
    %v323 = vrot.slane %v151, %v322
    %v324 = vsel %vm264, %v323, %v319
    %v325 = vlaneseq
    %v326 = vshrl.u32 %v325, 7
    %v327 = vsub.s32 %v266, %v326
    %v328 = vrot.slane %v154, %v327
    %v329 = vsel %vm271, %v328, %v324
    %v330 = vlaneseq
    %v331 = vshrl.u32 %v330, 7
    %v332 = vsub.s32 %v247, %v331
    %v333 = vrot.slane %v157, %v332
    %v334 = vlaneseq
    %v335 = vshrl.u32 %v334, 7
    %v336 = vsub.s32 %v252, %v335
    %v337 = vrot.slane %v160, %v336
    %v338 = vsel %vm257, %v337, %v333
    %v339 = vlaneseq
    %v340 = vshrl.u32 %v339, 7
    %v341 = vsub.s32 %v259, %v340
    %v342 = vrot.slane %v163, %v341
    %v343 = vsel %vm264, %v342, %v338
    %v344 = vlaneseq
    %v345 = vshrl.u32 %v344, 7
    %v346 = vsub.s32 %v266, %v345
    %v347 = vrot.slane %v166, %v346
    %v348 = vsel %vm271, %v347, %v343
    %v349 = vlaneseq
    %v350 = vshrl.u32 %v349, 7
    %v351 = vsub.s32 %v247, %v350
    %v352 = vrot.slane %v169, %v351
    %v353 = vlaneseq
    %v354 = vshrl.u32 %v353, 7
    %v355 = vsub.s32 %v252, %v354
    %v356 = vrot.slane %v172, %v355
    %v357 = vsel %vm257, %v356, %v352
    %v358 = vlaneseq
    %v359 = vshrl.u32 %v358, 7
    %v360 = vsub.s32 %v259, %v359
    %v361 = vrot.slane %v175, %v360
    %v362 = vsel %vm264, %v361, %v357
    %v363 = vlaneseq
    %v364 = vshrl.u32 %v363, 7
    %v365 = vsub.s32 %v266, %v364
    %v366 = vrot.slane %v178, %v365
    %v367 = vsel %vm271, %v366, %v362
    %v368 = vlaneseq
    %v369 = vshrl.u32 %v368, 7
    %v370 = vsub.s32 %v247, %v369
    %v371 = vrot.slane %v181, %v370
    %v372 = vlaneseq
    %v373 = vshrl.u32 %v372, 7
    %v374 = vsub.s32 %v252, %v373
    %v375 = vrot.slane %v184, %v374
    %v376 = vsel %vm257, %v375, %v371
    %v377 = vlaneseq
    %v378 = vshrl.u32 %v377, 7
    %v379 = vsub.s32 %v259, %v378
    %v380 = vrot.slane %v187, %v379
    %v381 = vsel %vm264, %v380, %v376
    %v382 = vlaneseq
    %v383 = vshrl.u32 %v382, 7
    %v384 = vsub.s32 %v266, %v383
    %v385 = vrot.slane %v190, %v384
    %v386 = vsel %vm271, %v385, %v381
    %v387 = vlaneseq
    %v388 = vshrl.u32 %v387, 7
    %v389 = vsub.s32 %v247, %v388
    %v390 = vrot.slane %v193, %v389
    %v391 = vlaneseq
    %v392 = vshrl.u32 %v391, 7
    %v393 = vsub.s32 %v252, %v392
    %v394 = vrot.slane %v196, %v393
    %v395 = vsel %vm257, %v394, %v390
    %v396 = vlaneseq
    %v397 = vshrl.u32 %v396, 7
    %v398 = vsub.s32 %v259, %v397
    %v399 = vrot.slane %v199, %v398
    %v400 = vsel %vm264, %v399, %v395
    %v401 = vlaneseq
    %v402 = vshrl.u32 %v401, 7
    %v403 = vsub.s32 %v266, %v402
    %v404 = vrot.slane %v202, %v403
    %v405 = vsel %vm271, %v404, %v400
    %vm406 = vcmask 1041409
    %v407 = vsel %vm406, %v291, %v272
    %vm408 = vcmask 1042434
    %v409 = vsel %vm408, %v310, %v407
    %vm410 = vcmask 1043459
    %v411 = vsel %vm410, %v329, %v409
    %vm412 = vcmask 1044484
    %v413 = vsel %vm412, %v348, %v411
    %vm414 = vcmask 1045509
    %v415 = vsel %vm414, %v367, %v413
    %vm416 = vcmask 1046534
    %v417 = vsel %vm416, %v386, %v415
    %vm418 = vcmask 1047559
    %v419 = vsel %vm418, %v405, %v417
    %vm420 = vcmask 261120
    %v421 = vsel %vm420, %v419, 0
    %423 = vmatprep.subr.mxu0 0.0
    %424 = vmatpush1.msra.mxu0 %v203
    %425 = vmatprep.subr.mxu0 0.0
    %426 = vmatpush1.msra.mxu0 %v204
    %427 = vmatprep.subr.mxu0 0.0
    %428 = vmatpush1.msra.mxu0 %v205
    %429 = vmatprep.subr.mxu0 0.0
    %430 = vmatpush1.msra.mxu0 %v206
    %431 = vmatprep.subr.mxu0 0.0
    %432 = vmatpush1.msra.mxu0 0.0
    %433 = vmatprep.subr.mxu0 0.0
    %434 = vmatpush1.msra.mxu0 0.0
    %435 = vmatprep.subr.mxu0 0.0
    %436 = vmatpush1.msra.mxu0 0.0
    %437 = vmatprep.subr.mxu0 0.0
    %438 = vmatpush1.msra.mxu0 0.0
    %439 = vmatprep.subr.mxu0 0.0
    %440 = vmatpush1.msra.mxu0 0.0
    %441 = vmatprep.subr.mxu0 0.0
    %442 = vmatpush1.msra.mxu0 0.0
    %443 = vmatprep.subr.mxu0 0.0
    %444 = vmatpush1.msra.mxu0 0.0
    %445 = vmatprep.subr.mxu0 0.0
    %446 = vmatpush1.msra.mxu0 0.0
    %447 = vmatprep.subr.mxu0 0.0
    %448 = vmatpush1.msra.mxu0 0.0
    %449 = vmatprep.subr.mxu0 0.0
    %450 = vmatpush1.msra.mxu0 0.0
    %451 = vmatprep.subr.mxu0 0.0
    %452 = vmatpush1.msra.mxu0 0.0
    %453 = vmatprep.subr.mxu0 0.0
    %454 = vmatpush1.msra.mxu0 0.0
    %455 = vmatprep.subr.mxu0 0.0
    %456 = vmatpush1.msra.mxu0 0.0
    %457 = vmatprep.subr.mxu0 0.0
    %458 = vmatpush1.msra.mxu0 0.0
    %459 = vmatprep.subr.mxu0 0.0
    %460 = vmatpush1.msra.mxu0 0.0
    %461 = vmatprep.subr.mxu0 0.0
    %462 = vmatpush1.msra.mxu0 0.0
    %463 = vmatprep.subr.mxu0 0.0
    %464 = vmatpush1.msra.mxu0 0.0
    %465 = vmatprep.subr.mxu0 0.0
    %466 = vmatpush1.msra.mxu0 0.0
    %467 = vmatprep.subr.mxu0 0.0
    %468 = vmatpush1.msra.mxu0 0.0
    %469 = vmatprep.subr.mxu0 0.0
    %470 = vmatpush1.msra.mxu0 0.0
    %471 = vmatprep.subr.mxu0 0.0
    %472 = vmatpush1.msra.mxu0 0.0
    %473 = vmatprep.subr.mxu0 0.0
    %474 = vmatpush1.msra.mxu0 0.0
    %475 = vmatprep.subr.mxu0 0.0
    %476 = vmatpush1.msra.mxu0 0.0
    %477 = vmatprep.subr.mxu0 0.0
    %478 = vmatpush1.msra.mxu0 0.0
    %479 = vmatprep.subr.mxu0 0.0
    %480 = vmatpush1.msra.mxu0 0.0
    %481 = vmatprep.subr.mxu0 0.0
    %482 = vmatpush1.msra.mxu0 0.0
    %483 = vmatprep.subr.mxu0 0.0
    %484 = vmatpush1.msra.mxu0 0.0
    %485 = vmatprep.subr.mxu0 0.0
    %486 = vmatpush1.msra.mxu0 0.0
    %487 = vmatprep.mubr.f32.mxu0 0.0
    %488 = vmatmul.mubr.f32.gmra.mrb[0].mxu0 %v421
    %v489 = vpop.f32.mrb[0].mxu0
    %v490 = vadd.f32 %v212, %v489
    %v491 = vpop.f32.mrb[0].mxu0
    %492 = vdwg.mxu0
    %v493 = vxor.u32 %v490, 2147483648
    %v494 = vmul.f32 %v493, 1.442695
    %v495 = vpow.pop %v494
    %v496 = vadd.f32 %v495, 1.0
    %v497 = vrcp.pop %v496
    %v498 = vmul.f32 1.0, %v497
    %499 = vst [vmem:[#allocation7] sm:$0xff] %v498
    // Predicated region
    $region22: #{tpu_custom_call.1} parent=1 // pred_check
      _
    $region23: #{tpu_custom_call.1} parent=1 // pred_check_branch
      %501 = sbr.rel (0) target = $region25
    $region24: #{tpu_custom_call.1} parent=1 // pred_region
      %s503 = ssub.s32 128, 128
      %504 = vsyncadd [#allocation4], %s503
      %s506 = sshll.u32 [#allocation7], 4
      %s507 = int_to_ptr.vmem [resolvable:$true] %s506
      %509 = dma.vmem_to_hbm [thread:$0]  %s507, 128, %s3, [#allocation4]
    $region25: #{tpu_custom_call.1} parent=1 // pred_fallthru
      _
    // Predicated region
    $region26: #{tpu_custom_call.1} parent=1 // pred_check
      _
    $region27: #{tpu_custom_call.1} parent=1 // pred_check_branch
      %511 = sbr.rel (0) target = $region29
    $region28: #{tpu_custom_call.1} parent=1 // pred_region
      %512 = dma.done [#allocation4], 128
    $region29: #{tpu_custom_call.1} parent=1 // pred_fallthru
      _
    %513 = vsyncpa [#allocation3], 1
    %514 = vsyncpa [#allocation6], 1
    %515 = vsyncpa [#allocation4], 1

</llo_original>
